<compile_context>
chip_gen: v7x
topology: tpu7x:2x2x1
jax: 0.10.0
libtpu: 0.0.40
codegen_flags: <defaults>
</compile_context>

<pallas_src>
import jax
import jax.numpy as jnp
from jax.experimental import pallas as pl
from jax.experimental.pallas import tpu as pltpu


def _round_up(n, m):
    return ((n + m - 1) // m) * m


def _rmlp_kernel(x_ref, w_emb_ref, b_emb_ref, w_t_ref, b_t_ref,
                 w_p_ref, b_p_ref, o_ref):
    # x_ref block: (TM, L); rows are flattened (batch, channel) pairs.
    x = x_ref[...].astype(jnp.float32)                        # (TM, L)
    L = x.shape[-1]

    # Instance statistics along the sequence axis (PyTorch std: unbiased, ddof=1).
    mean = jnp.mean(x, axis=-1, keepdims=True)                # (TM, 1)
    xc = x - mean
    var = jnp.sum(xc * xc, axis=-1, keepdims=True) * (1.0 / (L - 1))
    std = jnp.sqrt(var) + 1e-6                                # (TM, 1)
    inv_std = pl.reciprocal(std, approx=True)                 # EUP, not a VALU divide
    xn = (xc * inv_std).astype(jnp.bfloat16)                  # (TM, L) bf16 for the MXU

    # emb: Linear(seq_len -> d_model), f32 accumulation.
    e = jnp.dot(xn, w_emb_ref[...],
                preferred_element_type=jnp.float32) + b_emb_ref[...]        # (TM, D)

    # temporal: ReLU -> Dropout(identity in eval) -> Linear(D -> D), residual add.
    # TODO(synk): training-mode dropout is not implemented (eval-mode identity only).
    h = jnp.dot(jnp.maximum(e, 0.0).astype(jnp.bfloat16), w_t_ref[...],
                preferred_element_type=jnp.float32) + b_t_ref[...] + e      # (TM, D)

    # projection: Linear(D -> pred_len), unpadded lane-masked store.
    p = jnp.dot(h.astype(jnp.bfloat16), w_p_ref[...],
                preferred_element_type=jnp.float32) + b_p_ref[...]          # (TM, P)

    # De-normalize per row (exact std / mean, f32).
    o_ref[...] = (p * std + mean).astype(o_ref.dtype)


def _tile_footprint_bytes(tm, L, D, P):
    """Rough per-TC VMEM footprint for one tile configuration."""
    return (2 * tm * L * 4                 # x tile, double-buffered
            + 2 * tm * P * 4               # out tile, double-buffered
            + 3 * tm * max(D, P) * 4       # e / h / p f32 intermediates
            + (L * D + D * D + D * P) * 2  # resident bf16 weights
            + (2 * D + P) * 4)             # biases


def _choose_tm(rows, L, D, P, budget_bytes=32 * 1024 * 1024):
    """Row-tile size: as large as VMEM allows (<=1024), but leave >=2 grid steps
    when there are enough rows so v7x's two TensorCores both get work."""
    rows8 = _round_up(rows, 8)
    tm = min(1024, rows8)
    if rows8 >= 16:
        tm = min(tm, _round_up(rows8 // 2, 8))
    tm = max(tm, 8)
    while tm > 8 and _tile_footprint_bytes(tm, L, D, P) > budget_bytes:
        tm = max(8, _round_up(tm // 2, 8))
    return tm


def prepare_params(params):
    """One-time weight preprocessing (hoisted out of the per-call forward):
    bf16 weight casts for the MXU, biases reshaped to (1, N) f32 rows."""
    w_emb, b_emb, w_t, b_t, w_p, b_p = params
    D = w_emb.shape[1]
    P = w_p.shape[1]
    return (w_emb.astype(jnp.bfloat16),
            b_emb.reshape(1, D).astype(jnp.float32),
            w_t.astype(jnp.bfloat16),
            b_t.reshape(1, D).astype(jnp.float32),
            w_p.astype(jnp.bfloat16),
            b_p.reshape(1, P).astype(jnp.float32))


def rmlp_forward(x, prepped):
    """x: [B, seq_len, C] float32 -> [B, pred_len, C] float32."""
    w_emb_bf, b_emb2, w_t_bf, b_t2, w_p_bf, b_p2 = prepped
    B, L, C = x.shape
    D = w_emb_bf.shape[1]
    P = w_p_bf.shape[1]

    rows = B * C
    tm = _choose_tm(rows, L, D, P)
    rows_p = _round_up(rows, tm)

    # Flatten (B, C) into the row axis; pad rows up to a multiple of the tile.
    # (allow_input_fusion lets XLA fuse this reorientation into the pallas_call.)
    x_flat = jnp.transpose(x, (0, 2, 1)).reshape(rows, L)
    if rows_p != rows:
        x_flat = jnp.pad(x_flat, ((0, rows_p - rows), (0, 0)))

    vmem_limit = int(min(64 * 1024 * 1024,
                         max(8 * 1024 * 1024,
                             2 * _tile_footprint_bytes(tm, L, D, P))))

    out = pl.pallas_call(
        _rmlp_kernel,
        out_shape=jax.ShapeDtypeStruct((rows_p, P), x.dtype),
        grid_spec=pltpu.PrefetchScalarGridSpec(
            num_scalar_prefetch=0,
            grid=(rows_p // tm,),
            in_specs=[
                pl.BlockSpec((tm, L), lambda i: (i, 0)),
                pl.BlockSpec((L, D), lambda i: (0, 0)),       # resident weights
                pl.BlockSpec((1, D), lambda i: (0, 0)),
                pl.BlockSpec((D, D), lambda i: (0, 0)),
                pl.BlockSpec((1, D), lambda i: (0, 0)),
                pl.BlockSpec((D, P), lambda i: (0, 0)),
                pl.BlockSpec((1, P), lambda i: (0, 0)),
            ],
            out_specs=pl.BlockSpec((tm, P), lambda i: (i, 0)),  # last dim == full dim
        ),
        compiler_params=pltpu.CompilerParams(
            dimension_semantics=("parallel",),
            vmem_limit_bytes=vmem_limit,
            allow_input_fusion=[True, False, False, False, False, False, False]),
    )(x_flat, w_emb_bf, b_emb2, w_t_bf, b_t2, w_p_bf, b_p2)

    out = out[:rows, :].reshape(B, C, P)
    return jnp.transpose(out, (0, 2, 1))  # [B, pred_len, C]


def init_params(key, seq_len, d_model, pred_len):
    """Deterministic synthetic params. Weights stored transposed ([in, out])
    so the kernel computes y = x @ W + b (== PyTorch x @ weight.T + bias)."""
    ks = jax.random.split(key, 6)
    w_emb = jax.random.normal(ks[0], (seq_len, d_model), jnp.float32) * 0.05
    b_emb = jax.random.normal(ks[1], (d_model,), jnp.float32) * 0.05
    w_t = jax.random.normal(ks[2], (d_model, d_model), jnp.float32) * 0.05
    b_t = jax.random.normal(ks[3], (d_model,), jnp.float32) * 0.05
    w_p = jax.random.normal(ks[4], (d_model, pred_len), jnp.float32) * 0.05
    b_p = jax.random.normal(ks[5], (pred_len,), jnp.float32) * 0.05
    return (w_emb, b_emb, w_t, b_t, w_p, b_p)


def _reference(x, params):
    """Pure-JAX f32 reference matching the PyTorch forward (eval mode)."""
    w_emb, b_emb, w_t, b_t, w_p, b_p = params
    mean = jnp.mean(x, axis=1, keepdims=True)
    std = jnp.std(x, axis=1, keepdims=True, ddof=1) + 1e-6
    xn = (x - mean) / std
    xt = jnp.transpose(xn, (0, 2, 1))
    e = xt @ w_emb + b_emb
    h = jnp.maximum(e, 0.0) @ w_t + b_t + e
    p = h @ w_p + b_p
    pred = jnp.transpose(p, (0, 2, 1))
    return pred * std + mean


if __name__ == "__main__":
    B, seq_len, C = 2, 16, 4
    d_model, pred_len = 32, 8

    key = jax.random.PRNGKey(0)
    kx, kp = jax.random.split(key)
    x = jax.random.normal(kx, (B, seq_len, C), jnp.float32)
    params = init_params(kp, seq_len, d_model, pred_len)

    prepped = prepare_params(params)          # one-time weight preprocessing
    fwd = jax.jit(rmlp_forward)

    out = jax.block_until_ready(fwd(x, prepped))
    ref = _reference(x, params)

    assert out.shape == (B, pred_len, C)
    # bf16 MXU operands + approx reciprocal -> allow small numeric drift vs f32 ref.
    assert jnp.allclose(out, ref, atol=2e-2, rtol=2e-2), "mismatch vs reference"
    print("KERNEL_OK")
</pallas_src>

<mosaic_0001>
module attributes {stable_mosaic.version = 11 : i64} {
  func.func @_rmlp_kernel(%arg0: i32, %arg1: memref<8x16xf32, #tpu.memory_space<vmem>>, %arg2: memref<16x32xbf16, #tpu.memory_space<vmem>>, %arg3: memref<1x32xf32, #tpu.memory_space<vmem>>, %arg4: memref<32x32xbf16, #tpu.memory_space<vmem>>, %arg5: memref<1x32xf32, #tpu.memory_space<vmem>>, %arg6: memref<32x8xbf16, #tpu.memory_space<vmem>>, %arg7: memref<1x8xf32, #tpu.memory_space<vmem>>, %arg8: memref<8x8xf32, #tpu.memory_space<vmem>>) attributes {dimension_semantics = [#tpu.dimension_semantics<parallel>], iteration_bounds = array<i64: 1>, scalar_prefetch = 0 : i64, scratch_operands = 0 : i64, tpu.core_type = #tpu.core_type<tc>, window_params = [{transform_indices = @transform_0, window_bounds = array<i64: 8, 16>}, {pipeline_mode = #tpu.pipeline_mode<synchronous>, transform_indices = @transform_1, window_bounds = array<i64: 16, 32>}, {pipeline_mode = #tpu.pipeline_mode<synchronous>, transform_indices = @transform_2, window_bounds = array<i64: 1, 32>}, {pipeline_mode = #tpu.pipeline_mode<synchronous>, transform_indices = @transform_3, window_bounds = array<i64: 32, 32>}, {pipeline_mode = #tpu.pipeline_mode<synchronous>, transform_indices = @transform_4, window_bounds = array<i64: 1, 32>}, {pipeline_mode = #tpu.pipeline_mode<synchronous>, transform_indices = @transform_5, window_bounds = array<i64: 32, 8>}, {pipeline_mode = #tpu.pipeline_mode<synchronous>, transform_indices = @transform_6, window_bounds = array<i64: 1, 8>}, {transform_indices = @transform_7, window_bounds = array<i64: 8, 8>}]} {
    %c0 = arith.constant 0 : index
    %c0_0 = arith.constant 0 : index
    %0 = vector.load %arg1[%c0, %c0_0] : memref<8x16xf32, #tpu.memory_space<vmem>>, vector<8x16xf32>
    %cst = arith.constant dense<0.000000e+00> : vector<8xf32>
    %1 = vector.multi_reduction <add>, %0, %cst [1] : vector<8x16xf32> to vector<8xf32>
    %2 = vector.shape_cast %1 : vector<8xf32> to vector<8x1xf32>
    %cst_1 = arith.constant 1.600000e+01 : f32
    %3 = vector.broadcast %cst_1 : f32 to vector<8x1xf32>
    %4 = arith.divf %2, %3 : vector<8x1xf32>
    %5 = vector.broadcast %4 : vector<8x1xf32> to vector<8x16xf32>
    %6 = arith.subf %0, %5 : vector<8x16xf32>
    %7 = arith.mulf %6, %6 : vector<8x16xf32>
    %cst_2 = arith.constant dense<0.000000e+00> : vector<8xf32>
    %8 = vector.multi_reduction <add>, %7, %cst_2 [1] : vector<8x16xf32> to vector<8xf32>
    %9 = vector.shape_cast %8 : vector<8xf32> to vector<8x1xf32>
    %cst_3 = arith.constant 0.0666666701 : f32
    %10 = vector.broadcast %cst_3 : f32 to vector<8x1xf32>
    %11 = arith.mulf %9, %10 : vector<8x1xf32>
    %12 = math.sqrt %11 : vector<8x1xf32>
    %cst_4 = arith.constant 9.99999997E-7 : f32
    %13 = vector.broadcast %cst_4 : f32 to vector<8x1xf32>
    %14 = arith.addf %12, %13 : vector<8x1xf32>
    %15 = tpu.reciprocal %14 {approx = true} : vector<8x1xf32> -> vector<8x1xf32>
    %16 = vector.broadcast %15 : vector<8x1xf32> to vector<8x16xf32>
    %17 = arith.mulf %6, %16 : vector<8x16xf32>
    %18 = arith.truncf %17 : vector<8x16xf32> to vector<8x16xbf16>
    %c0_5 = arith.constant 0 : index
    %c0_6 = arith.constant 0 : index
    %19 = vector.load %arg2[%c0_5, %c0_6] : memref<16x32xbf16, #tpu.memory_space<vmem>>, vector<16x32xbf16>
    %cst_7 = arith.constant dense<0.000000e+00> : vector<8x32xf32>
    %20 = tpu.matmul %18, %19, %cst_7 {dimension_numbers = #tpu.dot_dimension_numbers<[1], [0], [0], [1], [0, 0, 1, 1], [], []>} : vector<8x16xbf16>, vector<16x32xbf16>, vector<8x32xf32> -> vector<8x32xf32>
    %c0_8 = arith.constant 0 : index
    %c0_9 = arith.constant 0 : index
    %21 = vector.load %arg3[%c0_8, %c0_9] : memref<1x32xf32, #tpu.memory_space<vmem>>, vector<1x32xf32>
    %22 = vector.broadcast %21 : vector<1x32xf32> to vector<8x32xf32>
    %23 = arith.addf %20, %22 : vector<8x32xf32>
    %cst_10 = arith.constant 0.000000e+00 : f32
    %24 = vector.broadcast %cst_10 : f32 to vector<8x32xf32>
    %25 = arith.maximumf %23, %24 : vector<8x32xf32>
    %26 = arith.truncf %25 : vector<8x32xf32> to vector<8x32xbf16>
    %c0_11 = arith.constant 0 : index
    %c0_12 = arith.constant 0 : index
    %27 = vector.load %arg4[%c0_11, %c0_12] : memref<32x32xbf16, #tpu.memory_space<vmem>>, vector<32x32xbf16>
    %cst_13 = arith.constant dense<0.000000e+00> : vector<8x32xf32>
    %28 = tpu.matmul %26, %27, %cst_13 {dimension_numbers = #tpu.dot_dimension_numbers<[1], [0], [0], [1], [0, 0, 1, 1], [], []>} : vector<8x32xbf16>, vector<32x32xbf16>, vector<8x32xf32> -> vector<8x32xf32>
    %c0_14 = arith.constant 0 : index
    %c0_15 = arith.constant 0 : index
    %29 = vector.load %arg5[%c0_14, %c0_15] : memref<1x32xf32, #tpu.memory_space<vmem>>, vector<1x32xf32>
    %30 = vector.broadcast %29 : vector<1x32xf32> to vector<8x32xf32>
    %31 = arith.addf %28, %30 : vector<8x32xf32>
    %32 = arith.addf %31, %23 : vector<8x32xf32>
    %33 = arith.truncf %32 : vector<8x32xf32> to vector<8x32xbf16>
    %c0_16 = arith.constant 0 : index
    %c0_17 = arith.constant 0 : index
    %34 = vector.load %arg6[%c0_16, %c0_17] : memref<32x8xbf16, #tpu.memory_space<vmem>>, vector<32x8xbf16>
    %cst_18 = arith.constant dense<0.000000e+00> : vector<8x8xf32>
    %35 = tpu.matmul %33, %34, %cst_18 {dimension_numbers = #tpu.dot_dimension_numbers<[1], [0], [0], [1], [0, 0, 1, 1], [], []>} : vector<8x32xbf16>, vector<32x8xbf16>, vector<8x8xf32> -> vector<8x8xf32>
    %c0_19 = arith.constant 0 : index
    %c0_20 = arith.constant 0 : index
    %36 = vector.load %arg7[%c0_19, %c0_20] : memref<1x8xf32, #tpu.memory_space<vmem>>, vector<1x8xf32>
    %37 = vector.broadcast %36 : vector<1x8xf32> to vector<8x8xf32>
    %38 = arith.addf %35, %37 : vector<8x8xf32>
    %39 = vector.broadcast %14 : vector<8x1xf32> to vector<8x8xf32>
    %40 = arith.mulf %38, %39 : vector<8x8xf32>
    %41 = vector.broadcast %4 : vector<8x1xf32> to vector<8x8xf32>
    %42 = arith.addf %40, %41 : vector<8x8xf32>
    %c0_21 = arith.constant 0 : index
    %c0_22 = arith.constant 0 : index
    %43 = vector.load %arg8[%c0_21, %c0_22] : memref<8x8xf32, #tpu.memory_space<vmem>>, vector<8x8xf32>
    tpu.vector_store %arg8[%c0_21, %c0_22], %42 {strides = array<i32>} : memref<8x8xf32, #tpu.memory_space<vmem>>, vector<8x8xf32>,
    return
  }
  func.func @transform_0(%arg0: i32) -> (i32, i32) {
    %c0_i32 = arith.constant 0 : i32
    %c0_i32_0 = arith.constant 0 : i32
    return %arg0, %c0_i32 : i32, i32
  }
  func.func @transform_1(%arg0: i32) -> (i32, i32) {
    %c0_i32 = arith.constant 0 : i32
    %c0_i32_0 = arith.constant 0 : i32
    %c0_i32_1 = arith.constant 0 : i32
    return %c0_i32, %c0_i32_0 : i32, i32
  }
  func.func @transform_2(%arg0: i32) -> (i32, i32) {
    %c0_i32 = arith.constant 0 : i32
    %c0_i32_0 = arith.constant 0 : i32
    %c0_i32_1 = arith.constant 0 : i32
    return %c0_i32, %c0_i32_0 : i32, i32
  }
  func.func @transform_3(%arg0: i32) -> (i32, i32) {
    %c0_i32 = arith.constant 0 : i32
    %c0_i32_0 = arith.constant 0 : i32
    %c0_i32_1 = arith.constant 0 : i32
    return %c0_i32, %c0_i32_0 : i32, i32
  }
  func.func @transform_4(%arg0: i32) -> (i32, i32) {
    %c0_i32 = arith.constant 0 : i32
    %c0_i32_0 = arith.constant 0 : i32
    %c0_i32_1 = arith.constant 0 : i32
    return %c0_i32, %c0_i32_0 : i32, i32
  }
  func.func @transform_5(%arg0: i32) -> (i32, i32) {
    %c0_i32 = arith.constant 0 : i32
    %c0_i32_0 = arith.constant 0 : i32
    %c0_i32_1 = arith.constant 0 : i32
    return %c0_i32, %c0_i32_0 : i32, i32
  }
  func.func @transform_6(%arg0: i32) -> (i32, i32) {
    %c0_i32 = arith.constant 0 : i32
    %c0_i32_0 = arith.constant 0 : i32
    %c0_i32_1 = arith.constant 0 : i32
    return %c0_i32, %c0_i32_0 : i32, i32
  }
  func.func @transform_7(%arg0: i32) -> (i32, i32) {
    %c0_i32 = arith.constant 0 : i32
    %c0_i32_0 = arith.constant 0 : i32
    return %arg0, %c0_i32 : i32, i32
  }
}

</mosaic_0001>

<llo_original>
// kernel: rmlp_forward.1
$region0: #{rmlp_forward.1}
  #allocation0 [shape = 'u32[]', space=smem, size = 0x4, offset = 0x4, fixed_abs, tag = 'smem constant byte address 0x4 - core index']
  #allocation1 [shape = 'u32[144,128]{1,0:T(1,128)}', space=vmem, size = 0x12000, scoped, tag = 'internal scratch']
  %s0 = inlined_call_operand.vmem [shape: f32[8,16], index: 0, kind: input, shape index: {}]
  %s1 = inlined_call_operand.hbm [shape: bf16[16,32], index: 1, kind: input, shape index: {}]
  %s2 = inlined_call_operand.vmem [shape: f32[1,32], index: 2, kind: input, shape index: {}]
  %s3 = inlined_call_operand.vmem [shape: bf16[32,32], index: 3, kind: input, shape index: {}]
  %s4 = inlined_call_operand.vmem [shape: f32[1,32], index: 4, kind: input, shape index: {}]
  %s5 = inlined_call_operand.vmem [shape: bf16[32,8], index: 5, kind: input, shape index: {}]
  %s6 = inlined_call_operand.vmem [shape: f32[1,8], index: 6, kind: input, shape index: {}]
  %s7 = inlined_call_operand.hbm [shape: f32[8,8], index: 7, kind: output, shape index: {}]
  %s8 = sld [smem:[#allocation0]]
  $region42: #{rmlp_forward.1} parent=0
    _
  %s10 = ssub.s32 1, %s8
  %s11 = scalar_select 0, %s10, %s8
  $region1: #{rmlp_forward.1} parent=0
    #allocation2 [shape = 'u8[4096]{0}', space=vmem, size = 0x1000, scoped, tag = 'input window, operand 1, single buffered']
    #allocation3 [shape = 's32[1]{0}', space=sflag, size = 0x4, scoped, tag = 'scoped memory for rmlp_forward.1']
    #allocation4 [shape = 's32[1]{0}', space=sflag, size = 0x4, scoped, tag = 'scoped memory for rmlp_forward.1']
    #allocation5 [shape = 'u8[4096]{0}', space=vmem, size = 0x1000, scoped, tag = 'output window, operand 0, single buffered']
    %12 = vsyncpa [#allocation3], 0
    %13 = vsyncpa [#allocation4], 0
    // Predicated region
    $region2: #{rmlp_forward.1} parent=1 // pred_check
      _
    $region3: #{rmlp_forward.1} parent=1 // pred_check_branch
      %15 = sbr.rel (0) target = $region5
    $region4: #{rmlp_forward.1} parent=1 // pred_region
      _
    $region5: #{rmlp_forward.1} parent=1 // pred_fallthru
      _
    // Predicated region
    $region6: #{rmlp_forward.1} parent=1 // pred_check
      _
    $region7: #{rmlp_forward.1} parent=1 // pred_check_branch
      %17 = sbr.rel (0) target = $region9
    $region8: #{rmlp_forward.1} parent=1 // pred_region
      %s19 = ssub.s32 128, 128
      %20 = vsyncadd [#allocation3], %s19
      %s21 = sshll.u32 [#allocation2], 4
      %s22 = int_to_ptr.vmem [resolvable:$true] %s21
      %27 = dma.hbm_to_vmem [thread:$0]  %s1, 128, %s22, [#allocation3], 64, 64, 4
    $region9: #{rmlp_forward.1} parent=1 // pred_fallthru
      _
    // Predicated region
    $region10: #{rmlp_forward.1} parent=1 // pred_check
      _
    $region11: #{rmlp_forward.1} parent=1 // pred_check_branch
      %29 = sbr.rel (0) target = $region13
    $region12: #{rmlp_forward.1} parent=1 // pred_region
      _
    $region13: #{rmlp_forward.1} parent=1 // pred_fallthru
      _
    // Predicated region
    $region14: #{rmlp_forward.1} parent=1 // pred_check
      _
    $region15: #{rmlp_forward.1} parent=1 // pred_check_branch
      %31 = sbr.rel (0) target = $region17
    $region16: #{rmlp_forward.1} parent=1 // pred_region
      _
    $region17: #{rmlp_forward.1} parent=1 // pred_fallthru
      _
    // Predicated region
    $region18: #{rmlp_forward.1} parent=1 // pred_check
      _
    $region19: #{rmlp_forward.1} parent=1 // pred_check_branch
      %33 = sbr.rel (0) target = $region21
    $region20: #{rmlp_forward.1} parent=1 // pred_region
      _
    $region21: #{rmlp_forward.1} parent=1 // pred_fallthru
      _
    // Predicated region
    $region22: #{rmlp_forward.1} parent=1 // pred_check
      _
    $region23: #{rmlp_forward.1} parent=1 // pred_check_branch
      %35 = sbr.rel (0) target = $region25
    $region24: #{rmlp_forward.1} parent=1 // pred_region
      _
    $region25: #{rmlp_forward.1} parent=1 // pred_fallthru
      _
    // Predicated region
    $region26: #{rmlp_forward.1} parent=1 // pred_check
      _
    $region27: #{rmlp_forward.1} parent=1 // pred_check_branch
      %37 = sbr.rel (0) target = $region29
    $region28: #{rmlp_forward.1} parent=1 // pred_region
      _
    $region29: #{rmlp_forward.1} parent=1 // pred_fallthru
      _
    // Predicated region
    $region30: #{rmlp_forward.1} parent=1 // pred_check
      _
    $region31: #{rmlp_forward.1} parent=1 // pred_check_branch
      %39 = sbr.rel (0) target = $region33
    $region32: #{rmlp_forward.1} parent=1 // pred_region
      %40 = dma.done [#allocation3], 128
    $region33: #{rmlp_forward.1} parent=1 // pred_fallthru
      _
    %v42 = vld [vmem:[%s0] sm:$0xff]
    %vm43 = vcmask 130048
    %v44 = vsel %vm43, %v42, 0.0
    %45 = vadd.xlane.f32.xlu0 %v44
    %v46 = vpop.xlane.xlu0 %45
    %v47 = vrcp.pop 16.0
    %v48 = vmul.f32 %v46, %v47
    %v49 = vsub.f32 %v42, %v48
    %v50 = vmul.f32 %v49, %v49
    %v51 = vsel %vm43, %v50, 0.0
    %52 = vadd.xlane.f32.xlu0 %v51
    %v53 = vpop.xlane.xlu0 %52
    %v54 = vmul.f32 %v53, 0.06666667
    %v55 = vrsqrt.pop %v54
    %v56 = vmul.f32 %v54, %v55
    %vm57 = vcmp.eq.f32.partialorder %v54, inf
    %v58 = vsel %vm57, %v54, %v56
    %vm59 = vcmp.eq.f32.partialorder %v54, 0.0
    %v60 = vand.u32 %v54, 2147483648
    %v61 = vsel %vm59, %v60, %v58
    %v62 = vadd.f32 %v61, 1e-06
    %v63 = vrcp.pop %v62
    %v64 = vmul.f32 %v49, %v63
    %v65 = vpack.c.bf16 %v64, %v64
    %v66 = vld [vmem:[#allocation2] sm:$0xf]
    %v67 = vld [vmem:[#allocation2 + $0x4] sm:$0xf]
    %v68 = vld [vmem:[%s2] sm:$0x1]
    %v70 = vlaneseq
    %v71 = vshrl.u32 %v70, 7
    %v72 = vsub.s32 0, %v71
    %v73 = vrot.slane %v68, %v72
    %v77 = vunpack.c.l.b16 %v66
    %v78 = vunpack.c.l.b16 %v67
    %v79 = vpack.c.b16 %v78, %v77
    %v82 = vsel %vm43, %v65, 0
    %84 = vmatprep.subr.bf16.mxu0 0
    %85 = vmatpush1.bf16.msra.mxu0 %v79
    %86 = vmatprep.subr.bf16.mxu0 0
    %87 = vmatpush1.bf16.msra.mxu0 0
    %88 = vmatprep.subr.bf16.mxu0 0
    %89 = vmatpush1.bf16.msra.mxu0 0
    %90 = vmatprep.subr.bf16.mxu0 0
    %91 = vmatpush1.bf16.msra.mxu0 0
    %92 = vmatprep.subr.bf16.mxu0 0
    %93 = vmatpush1.bf16.msra.mxu0 0
    %94 = vmatprep.subr.bf16.mxu0 0
    %95 = vmatpush1.bf16.msra.mxu0 0
    %96 = vmatprep.subr.bf16.mxu0 0
    %97 = vmatpush1.bf16.msra.mxu0 0
    %98 = vmatprep.subr.bf16.mxu0 0
    %99 = vmatpush1.bf16.msra.mxu0 0
    %100 = vmatprep.subr.bf16.mxu0 0
    %101 = vmatpush1.bf16.msra.mxu0 0
    %102 = vmatprep.subr.bf16.mxu0 0
    %103 = vmatpush1.bf16.msra.mxu0 0
    %104 = vmatprep.subr.bf16.mxu0 0
    %105 = vmatpush1.bf16.msra.mxu0 0
    %106 = vmatprep.subr.bf16.mxu0 0
    %107 = vmatpush1.bf16.msra.mxu0 0
    %108 = vmatprep.subr.bf16.mxu0 0
    %109 = vmatpush1.bf16.msra.mxu0 0
    %110 = vmatprep.subr.bf16.mxu0 0
    %111 = vmatpush1.bf16.msra.mxu0 0
    %112 = vmatprep.subr.bf16.mxu0 0
    %113 = vmatpush1.bf16.msra.mxu0 0
    %114 = vmatprep.subr.bf16.mxu0 0
    %115 = vmatpush1.bf16.msra.mxu0 0
    %116 = vmatprep.mubr.bf16.mxu0 0
    %117 = vmatmul.mubr.bf16.gmra.mrb[0].mxu0 %v82
    %v118 = vpop.f32.mrb[0].mxu0
    %v119 = vadd.f32 %v73, %v118
    %v120 = vpop.f32.mrb[0].mxu0
    %v121 = vpop.f32.mrb[0].mxu0
    %v122 = vpop.f32.mrb[0].mxu0
    %123 = vdwg.mxu0
    %v124 = vmax.f32 %v119, 0.0
    %v125 = vpack.c.bf16 %v124, %v124
    %v126 = vld [vmem:[%s3] sm:$0xf]
    %v127 = vld [vmem:[%s3 + $0x4] sm:$0xf]
    %v128 = vld [vmem:[%s3 + $0x8] sm:$0xf]
    %v129 = vld [vmem:[%s3 + $0xc] sm:$0xf]
    %v130 = vld [vmem:[%s4] sm:$0x1]
    %v132 = vlaneseq
    %v133 = vshrl.u32 %v132, 7
    %v134 = vsub.s32 0, %v133
    %v135 = vrot.slane %v130, %v134
    %v141 = vunpack.c.l.b16 %v126
    %v142 = vunpack.c.l.b16 %v127
    %v143 = vunpack.c.l.b16 %v128
    %v144 = vunpack.c.l.b16 %v129
    %v145 = vpack.c.b16 %v142, %v141
    %v146 = vpack.c.b16 %v144, %v143
    %vm149 = vcmask 261120
    %v151 = vsel %vm149, %v125, 0
    %153 = vmatprep.subr.bf16.mxu0 0
    %154 = vmatpush1.bf16.msra.mxu0 %v145
    %155 = vmatprep.subr.bf16.mxu0 0
    %156 = vmatpush1.bf16.msra.mxu0 %v146
    %157 = vmatprep.subr.bf16.mxu0 0
    %158 = vmatpush1.bf16.msra.mxu0 0
    %159 = vmatprep.subr.bf16.mxu0 0
    %160 = vmatpush1.bf16.msra.mxu0 0
    %161 = vmatprep.subr.bf16.mxu0 0
    %162 = vmatpush1.bf16.msra.mxu0 0
    %163 = vmatprep.subr.bf16.mxu0 0
    %164 = vmatpush1.bf16.msra.mxu0 0
    %165 = vmatprep.subr.bf16.mxu0 0
    %166 = vmatpush1.bf16.msra.mxu0 0
    %167 = vmatprep.subr.bf16.mxu0 0
    %168 = vmatpush1.bf16.msra.mxu0 0
    %169 = vmatprep.subr.bf16.mxu0 0
    %170 = vmatpush1.bf16.msra.mxu0 0
    %171 = vmatprep.subr.bf16.mxu0 0
    %172 = vmatpush1.bf16.msra.mxu0 0
    %173 = vmatprep.subr.bf16.mxu0 0
    %174 = vmatpush1.bf16.msra.mxu0 0
    %175 = vmatprep.subr.bf16.mxu0 0
    %176 = vmatpush1.bf16.msra.mxu0 0
    %177 = vmatprep.subr.bf16.mxu0 0
    %178 = vmatpush1.bf16.msra.mxu0 0
    %179 = vmatprep.subr.bf16.mxu0 0
    %180 = vmatpush1.bf16.msra.mxu0 0
    %181 = vmatprep.subr.bf16.mxu0 0
    %182 = vmatpush1.bf16.msra.mxu0 0
    %183 = vmatprep.subr.bf16.mxu0 0
    %184 = vmatpush1.bf16.msra.mxu0 0
    %185 = vmatprep.mubr.bf16.mxu0 0
    %186 = vmatmul.mubr.bf16.gmra.mrb[0].mxu0 %v151
    %v187 = vpop.f32.mrb[0].mxu0
    %v188 = vadd.f32 %v135, %v187
    %v189 = vpop.f32.mrb[0].mxu0
    %v190 = vpop.f32.mrb[0].mxu0
    %v191 = vpop.f32.mrb[0].mxu0
    %192 = vdwg.mxu0
    %v193 = vadd.f32 %v188, %v119
    %v194 = vpack.c.bf16 %v193, %v193
    %v195 = vld [vmem:[%s5] sm:$0xf]
    %v196 = vld [vmem:[%s5 + $0x4] sm:$0xf]
    %v197 = vld [vmem:[%s5 + $0x8] sm:$0xf]
    %v198 = vld [vmem:[%s5 + $0xc] sm:$0xf]
    %v199 = vld [vmem:[%s6] sm:$0x1]
    %v201 = vlaneseq
    %v202 = vshrl.u32 %v201, 7
    %v203 = vsub.s32 0, %v202
    %v204 = vrot.slane %v199, %v203
    %v210 = vunpack.c.l.b16 %v195
    %v211 = vunpack.c.l.b16 %v196
    %v212 = vunpack.c.l.b16 %v197
    %v213 = vunpack.c.l.b16 %v198
    %v214 = vpack.c.b16 %v211, %v210
    %v215 = vpack.c.b16 %v213, %v212
    %v219 = vsel %vm149, %v194, 0
    %221 = vmatprep.subr.bf16.mxu0 0
    %222 = vmatpush1.bf16.msra.mxu0 %v214
    %223 = vmatprep.subr.bf16.mxu0 0
    %224 = vmatpush1.bf16.msra.mxu0 %v215
    %225 = vmatprep.subr.bf16.mxu0 0
    %226 = vmatpush1.bf16.msra.mxu0 0
    %227 = vmatprep.subr.bf16.mxu0 0
    %228 = vmatpush1.bf16.msra.mxu0 0
    %229 = vmatprep.subr.bf16.mxu0 0
    %230 = vmatpush1.bf16.msra.mxu0 0
    %231 = vmatprep.subr.bf16.mxu0 0
    %232 = vmatpush1.bf16.msra.mxu0 0
    %233 = vmatprep.subr.bf16.mxu0 0
    %234 = vmatpush1.bf16.msra.mxu0 0
    %235 = vmatprep.subr.bf16.mxu0 0
    %236 = vmatpush1.bf16.msra.mxu0 0
    %237 = vmatprep.subr.bf16.mxu0 0
    %238 = vmatpush1.bf16.msra.mxu0 0
    %239 = vmatprep.subr.bf16.mxu0 0
    %240 = vmatpush1.bf16.msra.mxu0 0
    %241 = vmatprep.subr.bf16.mxu0 0
    %242 = vmatpush1.bf16.msra.mxu0 0
    %243 = vmatprep.subr.bf16.mxu0 0
    %244 = vmatpush1.bf16.msra.mxu0 0
    %245 = vmatprep.subr.bf16.mxu0 0
    %246 = vmatpush1.bf16.msra.mxu0 0
    %247 = vmatprep.subr.bf16.mxu0 0
    %248 = vmatpush1.bf16.msra.mxu0 0
    %249 = vmatprep.subr.bf16.mxu0 0
    %250 = vmatpush1.bf16.msra.mxu0 0
    %251 = vmatprep.subr.bf16.mxu0 0
    %252 = vmatpush1.bf16.msra.mxu0 0
    %253 = vmatprep.mubr.bf16.mxu0 0
    %254 = vmatmul.mubr.bf16.gmra.mrb[0].mxu0 %v219
    %v255 = vpop.f32.mrb[0].mxu0
    %v256 = vadd.f32 %v204, %v255
    %v257 = vpop.f32.mrb[0].mxu0
    %v258 = vpop.f32.mrb[0].mxu0
    %v259 = vpop.f32.mrb[0].mxu0
    %260 = vdwg.mxu0
    %v261 = vmul.f32 %v256, %v62
    %v262 = vadd.f32 %v261, %v48
    %vm263 = vcmask 64512
    %264 = vst.msk [vmem:[#allocation5] sm:$0xff] %vm263, %v262
    // Predicated region
    $region34: #{rmlp_forward.1} parent=1 // pred_check
      _
    $region35: #{rmlp_forward.1} parent=1 // pred_check_branch
      %266 = sbr.rel (0) target = $region37
    $region36: #{rmlp_forward.1} parent=1 // pred_region
      %s268 = ssub.s32 128, 128
      %269 = vsyncadd [#allocation4], %s268
      %s271 = sshll.u32 [#allocation5], 4
      %s272 = int_to_ptr.vmem [resolvable:$true] %s271
      %274 = dma.vmem_to_hbm [thread:$0]  %s272, 128, %s7, [#allocation4]
    $region37: #{rmlp_forward.1} parent=1 // pred_fallthru
      _
    // Predicated region
    $region38: #{rmlp_forward.1} parent=1 // pred_check
      _
    $region39: #{rmlp_forward.1} parent=1 // pred_check_branch
      %276 = sbr.rel (0) target = $region41
    $region40: #{rmlp_forward.1} parent=1 // pred_region
      %277 = dma.done [#allocation4], 128
    $region41: #{rmlp_forward.1} parent=1 // pred_fallthru
      _
    %278 = vsyncpa [#allocation3], 1
    %279 = vsyncpa [#allocation4], 1

</llo_original>
